<compile_context>
chip_gen: v7x
topology: tpu7x:2x2x1
jax: 0.10.0
libtpu: 0.0.40
codegen_flags: <defaults>
</compile_context>

<pallas_src>
import functools

import jax
import jax.numpy as jnp
from jax.experimental import pallas as pl
from jax.experimental.pallas import tpu as pltpu


def _prescale_model_kernel(obs_ref, min_ref, inv_ref, w_ref, b_ref, out_ref):
    """Fused prescale (VPU) + linear layer (MXU) for one batch tile.

    obs_ref: [TB, F] raw observations (any numeric dtype)
    min_ref: [1, F]  min_vals, forced to 0 where (max-min)==0
    inv_ref: [1, F]  1/(max-min), forced to 1 where (max-min)==0
    w_ref:   [F, H]  model weights (f32, or bf16 on the opt-in path)
    b_ref:   [1, H]  model bias (f32)
    out_ref: [TB, H] f32
    """
    cdt = w_ref.dtype                       # prescale/matmul compute dtype
    obs = obs_ref[...].astype(cdt)          # obs.float() (bf16 only when opted in)
    # range==0 handling is folded into (min, inv), so this is exactly
    # where(range==0, obs, (obs-min)/range) from the reference.
    scaled = (obs - min_ref[...]) * inv_ref[...]
    out_ref[...] = (
        jnp.dot(scaled, w_ref[...], preferred_element_type=jnp.float32)
        + b_ref[...]
    )


def _round_up(x: int, m: int) -> int:
    return ((x + m - 1) // m) * m


def _vmem_limit_bytes() -> int:
    # ~3/4 of physical VMEM, capped at 100 MiB:
    #   v5e/v6e (128 MiB) -> 96 MiB ; v7x (64 MiB) -> 48 MiB.
    # Safe 32 MiB fallback if the hardware query is unavailable.
    try:
        cap = int(pltpu.get_tpu_info().vmem_capacity_bytes)
        return min(cap * 3 // 4, 100 * 1024 * 1024)
    except Exception:
        return 32 * 1024 * 1024


def _pick_batch_tile(B, F, H, obs_itemsize, vmem_limit, requested):
    if requested is not None:
        # Sanitize: non-multiple-of-8 tiles would violate the (8,128) rule.
        tb = _round_up(max(int(requested), 8), 8)
    else:
        # Double-buffered obs + out tiles should use at most ~half the budget.
        per_row = 2 * (F * obs_itemsize + H * 4)
        tb = max(256, (vmem_limit // 2) // max(per_row, 1))
        tb = min(tb, 4096)
        # For large batches keep >=2 grid steps so the "parallel" batch axis
        # can occupy both v7x TensorCores.
        if B >= 2048:
            tb = min(tb, _round_up(pl.cdiv(B, 2), 8))
        tb = _round_up(tb, 8)
    return min(tb, _round_up(B, 8))


@functools.partial(
    jax.jit,
    static_argnames=("matmul_dtype", "batch_tile", "single_buffer_residents"),
)
def _forward_impl(obs, min_vals, max_vals, w, b, *, matmul_dtype, batch_tile,
                  single_buffer_residents):
    B, F = obs.shape
    H = w.shape[1]

    vmem_limit = _vmem_limit_bytes()
    TB = _pick_batch_tile(B, F, H, jnp.dtype(obs.dtype).itemsize, vmem_limit,
                          batch_tile)
    grid = (pl.cdiv(B, TB),)

    # Fold the (max-min)==0 branch into the constants: const columns become
    # (obs - 0) * 1 == obs, matching torch.where(range==0, obs, scaled).
    mn = min_vals.astype(jnp.float32)
    rng = max_vals.astype(jnp.float32) - mn
    is_const = rng == 0.0
    inv = jnp.where(is_const, 1.0, 1.0 / jnp.where(is_const, 1.0, rng))
    mn = jnp.where(is_const, 0.0, mn)

    mn2 = mn.reshape(1, F).astype(matmul_dtype)
    inv2 = inv.reshape(1, F).astype(matmul_dtype)
    w_c = w.astype(matmul_dtype)
    b2 = b.reshape(1, H).astype(jnp.float32)

    # Resident operands: constant index_map; single-buffer them when supported
    # so they don't burn a dead second VMEM buffer (matters on v7x).
    resident = {}
    if single_buffer_residents:
        resident["pipeline_mode"] = pl.Buffered(1)

    out = pl.pallas_call(
        _prescale_model_kernel,
        out_shape=jax.ShapeDtypeStruct((B, H), jnp.float32),
        grid_spec=pltpu.PrefetchScalarGridSpec(
            num_scalar_prefetch=0,
            grid=grid,
            in_specs=[
                pl.BlockSpec((TB, F), lambda i: (i, 0)),              # obs tile
                pl.BlockSpec((1, F), lambda i: (0, 0), **resident),   # min_vals
                pl.BlockSpec((1, F), lambda i: (0, 0), **resident),   # 1/range
                pl.BlockSpec((F, H), lambda i: (0, 0), **resident),   # W
                pl.BlockSpec((1, H), lambda i: (0, 0), **resident),   # b
            ],
            out_specs=pl.BlockSpec((TB, H), lambda i: (i, 0)),
        ),
        compiler_params=pltpu.CompilerParams(
            dimension_semantics=("parallel",),       # megacore batch sharding
            vmem_limit_bytes=vmem_limit,
        ),
    )(obs, mn2, inv2, w_c, b2)
    return out


def default_prescaler_forward(obs, min_vals, max_vals, w, b,
                              *, matmul_dtype=jnp.float32, batch_tile=None):
    """obs: [B, F] (any numeric dtype), min/max: [F], w: [F, H], b: [H] -> [B, H] f32."""
    try:
        return _forward_impl(obs, min_vals, max_vals, w, b,
                             matmul_dtype=matmul_dtype, batch_tile=batch_tile,
                             single_buffer_residents=True)
    except Exception:
        # Fallback for Pallas versions without pipeline_mode / Buffered(1):
        # identical numerics, default double-buffering for the residents.
        return _forward_impl(obs, min_vals, max_vals, w, b,
                             matmul_dtype=matmul_dtype, batch_tile=batch_tile,
                             single_buffer_residents=False)


def _reference(obs, min_vals, max_vals, w, b):
    obs_f = obs.astype(jnp.float32)
    rng = max_vals - min_vals
    scaled = jnp.where(rng == 0.0, obs_f, (obs_f - min_vals) / rng)
    return (jnp.dot(scaled, w.astype(jnp.float32),
                    precision=jax.lax.Precision.HIGHEST)
            + b.astype(jnp.float32))


if __name__ == "__main__":
    key = jax.random.PRNGKey(0)
    k_obs, k_obs2, k_w, k_b = jax.random.split(key, 4)

    B, F, H = 8, 16, 32   # batch, observation_size (len(nvec)), model hidden size

    # observation_space.nvec; nvec==1 features exercise the (max-min)==0 branch.
    nvec = jnp.array([5, 7, 1, 3, 9, 1, 4, 6, 2, 8, 1, 5, 3, 7, 2, 4],
                     dtype=jnp.int32)
    assert nvec.shape[0] == F
    min_vals = jnp.zeros((F,), dtype=jnp.float32)        # torch.zeros(len(nvec))
    max_vals = (nvec - 1).astype(jnp.float32)            # nvec - 1

    obs = jax.random.randint(k_obs, (B, F), minval=0, maxval=10, dtype=jnp.int32)

    # TODO(synk): the real `self.model` is injected externally; a single linear
    # layer is used here as a deterministic synthetic stand-in.
    w = jax.random.normal(k_w, (F, H), dtype=jnp.float32) * 0.1
    b = jax.random.normal(k_b, (H,), dtype=jnp.float32) * 0.1

    # 1) Small batch, f32 path (grid collapses to a single tile).
    out = default_prescaler_forward(obs, min_vals, max_vals, w, b)
    out = jax.block_until_ready(out)
    ref = _reference(obs, min_vals, max_vals, w, b)
    assert out.shape == (B, H)
    assert jnp.allclose(out, ref, atol=1e-4, rtol=1e-4)

    # 2) Larger batch with a small forced batch tile: ragged grid (3 tiles,
    #    last tile partial — no batch padding, OOB rows are discarded).
    B2 = 40
    obs2 = jax.random.randint(k_obs2, (B2, F), minval=0, maxval=10, dtype=jnp.int32)
    out2 = default_prescaler_forward(obs2, min_vals, max_vals, w, b, batch_tile=16)
    out2 = jax.block_until_ready(out2)
    ref2 = _reference(obs2, min_vals, max_vals, w, b)
    assert out2.shape == (B2, H)
    assert jnp.allclose(out2, ref2, atol=1e-4, rtol=1e-4)

    # 3) bf16 prescale + MXU operands (v6e/v7x opt-in) with relaxed tolerance.
    out3 = default_prescaler_forward(obs, min_vals, max_vals, w, b,
                                     matmul_dtype=jnp.bfloat16)
    out3 = jax.block_until_ready(out3)
    assert jnp.allclose(out3, ref, atol=5e-2, rtol=5e-2)

    print("KERNEL_OK")
</pallas_src>

<mosaic_0001>
module attributes {stable_mosaic.version = 11 : i64} {
  func.func @_prescale_model_kernel(%arg0: i32, %arg1: memref<8x16xi32, #tpu.memory_space<vmem>>, %arg2: memref<1x16xf32, #tpu.memory_space<vmem>>, %arg3: memref<1x16xf32, #tpu.memory_space<vmem>>, %arg4: memref<16x32xf32, #tpu.memory_space<vmem>>, %arg5: memref<1x32xf32, #tpu.memory_space<vmem>>, %arg6: memref<8x32xf32, #tpu.memory_space<vmem>>) attributes {dimension_semantics = [#tpu.dimension_semantics<parallel>], iteration_bounds = array<i64: 1>, scalar_prefetch = 0 : i64, scratch_operands = 0 : i64, tpu.core_type = #tpu.core_type<tc>, window_params = [{transform_indices = @transform_0, window_bounds = array<i64: 8, 16>}, {pipeline_mode = #tpu.pipeline_mode<synchronous>, transform_indices = @transform_1, window_bounds = array<i64: 1, 16>}, {pipeline_mode = #tpu.pipeline_mode<synchronous>, transform_indices = @transform_2, window_bounds = array<i64: 1, 16>}, {pipeline_mode = #tpu.pipeline_mode<synchronous>, transform_indices = @transform_3, window_bounds = array<i64: 16, 32>}, {pipeline_mode = #tpu.pipeline_mode<synchronous>, transform_indices = @transform_4, window_bounds = array<i64: 1, 32>}, {transform_indices = @transform_5, window_bounds = array<i64: 8, 32>}]} {
    %c0 = arith.constant 0 : index
    %c0_0 = arith.constant 0 : index
    %0 = vector.load %arg1[%c0, %c0_0] : memref<8x16xi32, #tpu.memory_space<vmem>>, vector<8x16xi32>
    %1 = arith.sitofp %0 : vector<8x16xi32> to vector<8x16xf32>
    %c0_1 = arith.constant 0 : index
    %c0_2 = arith.constant 0 : index
    %2 = vector.load %arg2[%c0_1, %c0_2] : memref<1x16xf32, #tpu.memory_space<vmem>>, vector<1x16xf32>
    %3 = vector.broadcast %2 : vector<1x16xf32> to vector<8x16xf32>
    %4 = arith.subf %1, %3 : vector<8x16xf32>
    %c0_3 = arith.constant 0 : index
    %c0_4 = arith.constant 0 : index
    %5 = vector.load %arg3[%c0_3, %c0_4] : memref<1x16xf32, #tpu.memory_space<vmem>>, vector<1x16xf32>
    %6 = vector.broadcast %5 : vector<1x16xf32> to vector<8x16xf32>
    %7 = arith.mulf %4, %6 : vector<8x16xf32>
    %c0_5 = arith.constant 0 : index
    %c0_6 = arith.constant 0 : index
    %8 = vector.load %arg4[%c0_5, %c0_6] : memref<16x32xf32, #tpu.memory_space<vmem>>, vector<16x32xf32>
    %cst = arith.constant dense<0.000000e+00> : vector<8x32xf32>
    %9 = tpu.matmul %7, %8, %cst {dimension_numbers = #tpu.dot_dimension_numbers<[1], [0], [0], [1], [0, 0, 1, 1], [], []>} : vector<8x16xf32>, vector<16x32xf32>, vector<8x32xf32> -> vector<8x32xf32>
    %c0_7 = arith.constant 0 : index
    %c0_8 = arith.constant 0 : index
    %10 = vector.load %arg5[%c0_7, %c0_8] : memref<1x32xf32, #tpu.memory_space<vmem>>, vector<1x32xf32>
    %11 = vector.broadcast %10 : vector<1x32xf32> to vector<8x32xf32>
    %12 = arith.addf %9, %11 : vector<8x32xf32>
    %c0_9 = arith.constant 0 : index
    %c0_10 = arith.constant 0 : index
    %13 = vector.load %arg6[%c0_9, %c0_10] : memref<8x32xf32, #tpu.memory_space<vmem>>, vector<8x32xf32>
    tpu.vector_store %arg6[%c0_9, %c0_10], %12 {strides = array<i32>} : memref<8x32xf32, #tpu.memory_space<vmem>>, vector<8x32xf32>,
    return
  }
  func.func @transform_0(%arg0: i32) -> (i32, i32) {
    %c0_i32 = arith.constant 0 : i32
    %c0_i32_0 = arith.constant 0 : i32
    return %arg0, %c0_i32 : i32, i32
  }
  func.func @transform_1(%arg0: i32) -> (i32, i32) {
    %c0_i32 = arith.constant 0 : i32
    %c0_i32_0 = arith.constant 0 : i32
    %c0_i32_1 = arith.constant 0 : i32
    return %c0_i32, %c0_i32_0 : i32, i32
  }
  func.func @transform_2(%arg0: i32) -> (i32, i32) {
    %c0_i32 = arith.constant 0 : i32
    %c0_i32_0 = arith.constant 0 : i32
    %c0_i32_1 = arith.constant 0 : i32
    return %c0_i32, %c0_i32_0 : i32, i32
  }
  func.func @transform_3(%arg0: i32) -> (i32, i32) {
    %c0_i32 = arith.constant 0 : i32
    %c0_i32_0 = arith.constant 0 : i32
    %c0_i32_1 = arith.constant 0 : i32
    return %c0_i32, %c0_i32_0 : i32, i32
  }
  func.func @transform_4(%arg0: i32) -> (i32, i32) {
    %c0_i32 = arith.constant 0 : i32
    %c0_i32_0 = arith.constant 0 : i32
    %c0_i32_1 = arith.constant 0 : i32
    return %c0_i32, %c0_i32_0 : i32, i32
  }
  func.func @transform_5(%arg0: i32) -> (i32, i32) {
    %c0_i32 = arith.constant 0 : i32
    %c0_i32_0 = arith.constant 0 : i32
    return %arg0, %c0_i32 : i32, i32
  }
}

module attributes {stable_mosaic.version = 11 : i64} {
  func.func @_prescale_model_kernel(%arg0: i32, %arg1: memref<8x16xi32, #tpu.memory_space<vmem>>, %arg2: memref<1x16xf32, #tpu.memory_space<vmem>>, %arg3: memref<1x16xf32, #tpu.memory_space<vmem>>, %arg4: memref<16x32xf32, #tpu.memory_space<vmem>>, %arg5: memref<1x32xf32, #tpu.memory_space<vmem>>, %arg6: memref<8x32xf32, #tpu.memory_space<vmem>>) attributes {dimension_semantics = [#tpu.dimension_semantics<parallel>], iteration_bounds = array<i64: 1>, scalar_prefetch = 0 : i64, scratch_operands = 0 : i64, tpu.core_type = #tpu.core_type<tc>, window_params = [{transform_indices = @transform_0, window_bounds = array<i64: 8, 16>}, {pipeline_mode = #tpu.pipeline_mode<synchronous>, transform_indices = @transform_1, window_bounds = array<i64: 1, 16>}, {pipeline_mode = #tpu.pipeline_mode<synchronous>, transform_indices = @transform_2, window_bounds = array<i64: 1, 16>}, {pipeline_mode = #tpu.pipeline_mode<synchronous>, transform_indices = @transform_3, window_bounds = array<i64: 16, 32>}, {pipeline_mode = #tpu.pipeline_mode<synchronous>, transform_indices = @transform_4, window_bounds = array<i64: 1, 32>}, {transform_indices = @transform_5, window_bounds = array<i64: 8, 32>}]} {
    %c0 = arith.constant 0 : index
    %c0_0 = arith.constant 0 : index
    %0 = vector.load %arg1[%c0, %c0_0] : memref<8x16xi32, #tpu.memory_space<vmem>>, vector<8x16xi32>
    %1 = arith.sitofp %0 : vector<8x16xi32> to vector<8x16xf32>
    %c0_1 = arith.constant 0 : index
    %c0_2 = arith.constant 0 : index
    %2 = vector.load %arg2[%c0_1, %c0_2] : memref<1x16xf32, #tpu.memory_space<vmem>>, vector<1x16xf32>
    %3 = vector.broadcast %2 : vector<1x16xf32> to vector<8x16xf32>
    %4 = arith.subf %1, %3 : vector<8x16xf32>
    %c0_3 = arith.constant 0 : index
    %c0_4 = arith.constant 0 : index
    %5 = vector.load %arg3[%c0_3, %c0_4] : memref<1x16xf32, #tpu.memory_space<vmem>>, vector<1x16xf32>
    %6 = vector.broadcast %5 : vector<1x16xf32> to vector<8x16xf32>
    %7 = arith.mulf %4, %6 : vector<8x16xf32>
    %c0_5 = arith.constant 0 : index
    %c0_6 = arith.constant 0 : index
    %8 = vector.load %arg4[%c0_5, %c0_6] : memref<16x32xf32, #tpu.memory_space<vmem>>, vector<16x32xf32>
    %cst = arith.constant dense<0.000000e+00> : vector<8x32xf32>
    %9 = tpu.matmul %7, %8, %cst {dimension_numbers = #tpu.dot_dimension_numbers<[1], [0], [0], [1], [0, 0, 1, 1], [], []>} : vector<8x16xf32>, vector<16x32xf32>, vector<8x32xf32> -> vector<8x32xf32>
    %c0_7 = arith.constant 0 : index
    %c0_8 = arith.constant 0 : index
    %10 = vector.load %arg5[%c0_7, %c0_8] : memref<1x32xf32, #tpu.memory_space<vmem>>, vector<1x32xf32>
    %11 = vector.broadcast %10 : vector<1x32xf32> to vector<8x32xf32>
    %12 = arith.addf %9, %11 : vector<8x32xf32>
    %c0_9 = arith.constant 0 : index
    %c0_10 = arith.constant 0 : index
    %13 = vector.load %arg6[%c0_9, %c0_10] : memref<8x32xf32, #tpu.memory_space<vmem>>, vector<8x32xf32>
    tpu.vector_store %arg6[%c0_9, %c0_10], %12 {strides = array<i32>} : memref<8x32xf32, #tpu.memory_space<vmem>>, vector<8x32xf32>,
    return
  }
  func.func @transform_0(%arg0: i32) -> (i32, i32) {
    %c0_i32 = arith.constant 0 : i32
    %c0_i32_0 = arith.constant 0 : i32
    return %arg0, %c0_i32 : i32, i32
  }
  func.func @transform_1(%arg0: i32) -> (i32, i32) {
    %c0_i32 = arith.constant 0 : i32
    %c0_i32_0 = arith.constant 0 : i32
    %c0_i32_1 = arith.constant 0 : i32
    return %c0_i32, %c0_i32_0 : i32, i32
  }
  func.func @transform_2(%arg0: i32) -> (i32, i32) {
    %c0_i32 = arith.constant 0 : i32
    %c0_i32_0 = arith.constant 0 : i32
    %c0_i32_1 = arith.constant 0 : i32
    return %c0_i32, %c0_i32_0 : i32, i32
  }
  func.func @transform_3(%arg0: i32) -> (i32, i32) {
    %c0_i32 = arith.constant 0 : i32
    %c0_i32_0 = arith.constant 0 : i32
    %c0_i32_1 = arith.constant 0 : i32
    return %c0_i32, %c0_i32_0 : i32, i32
  }
  func.func @transform_4(%arg0: i32) -> (i32, i32) {
    %c0_i32 = arith.constant 0 : i32
    %c0_i32_0 = arith.constant 0 : i32
    %c0_i32_1 = arith.constant 0 : i32
    return %c0_i32, %c0_i32_0 : i32, i32
  }
  func.func @transform_5(%arg0: i32) -> (i32, i32) {
    %c0_i32 = arith.constant 0 : i32
    %c0_i32_0 = arith.constant 0 : i32
    return %arg0, %c0_i32 : i32, i32
  }
}

</mosaic_0001>

<llo_original>
// kernel: _forward_impl.1
$region0: #{_forward_impl.1}
  #allocation0 [shape = 'u32[]', space=smem, size = 0x4, offset = 0x4, fixed_abs, tag = 'smem constant byte address 0x4 - core index']
  #allocation1 [shape = 'u32[144,128]{1,0:T(1,128)}', space=vmem, size = 0x12000, scoped, tag = 'internal scratch']
  %s0 = inlined_call_operand.vmem [shape: s32[8,16], index: 0, kind: input, shape index: {}]
  %s1 = inlined_call_operand.vmem [shape: f32[1,16], index: 1, kind: input, shape index: {}]
  %s2 = inlined_call_operand.vmem [shape: f32[1,16], index: 2, kind: input, shape index: {}]
  %s3 = inlined_call_operand.vmem [shape: f32[16,32], index: 3, kind: input, shape index: {}]
  %s4 = inlined_call_operand.vmem [shape: f32[1,32], index: 4, kind: input, shape index: {}]
  %s5 = inlined_call_operand.hbm [shape: f32[8,32], index: 5, kind: output, shape index: {}]
  %s6 = sld [smem:[#allocation0]]
  $region30: #{_forward_impl.1} parent=0
    _
  %s8 = ssub.s32 1, %s6
  %s9 = scalar_select 0, %s8, %s6
  $region1: #{_forward_impl.1} parent=0
    #allocation2 [shape = 'u8[4096]{0}', space=vmem, size = 0x1000, scoped, tag = 'output window, operand 0, single buffered']
    #allocation3 [shape = 's32[1]{0}', space=sflag, size = 0x4, scoped, tag = 'scoped memory for _forward_impl.1']
    %10 = vsyncpa [#allocation3], 0
    // Predicated region
    $region2: #{_forward_impl.1} parent=1 // pred_check
      _
    $region3: #{_forward_impl.1} parent=1 // pred_check_branch
      %12 = sbr.rel (0) target = $region5
    $region4: #{_forward_impl.1} parent=1 // pred_region
      _
    $region5: #{_forward_impl.1} parent=1 // pred_fallthru
      _
    // Predicated region
    $region6: #{_forward_impl.1} parent=1 // pred_check
      _
    $region7: #{_forward_impl.1} parent=1 // pred_check_branch
      %14 = sbr.rel (0) target = $region9
    $region8: #{_forward_impl.1} parent=1 // pred_region
      _
    $region9: #{_forward_impl.1} parent=1 // pred_fallthru
      _
    // Predicated region
    $region10: #{_forward_impl.1} parent=1 // pred_check
      _
    $region11: #{_forward_impl.1} parent=1 // pred_check_branch
      %16 = sbr.rel (0) target = $region13
    $region12: #{_forward_impl.1} parent=1 // pred_region
      _
    $region13: #{_forward_impl.1} parent=1 // pred_fallthru
      _
    // Predicated region
    $region14: #{_forward_impl.1} parent=1 // pred_check
      _
    $region15: #{_forward_impl.1} parent=1 // pred_check_branch
      %18 = sbr.rel (0) target = $region17
    $region16: #{_forward_impl.1} parent=1 // pred_region
      _
    $region17: #{_forward_impl.1} parent=1 // pred_fallthru
      _
    // Predicated region
    $region18: #{_forward_impl.1} parent=1 // pred_check
      _
    $region19: #{_forward_impl.1} parent=1 // pred_check_branch
      %20 = sbr.rel (0) target = $region21
    $region20: #{_forward_impl.1} parent=1 // pred_region
      _
    $region21: #{_forward_impl.1} parent=1 // pred_fallthru
      _
    %v21 = vld [vmem:[%s0] sm:$0xff]
    %v22 = vcvt.s32.f32 %v21
    %v23 = vld [vmem:[%s1] sm:$0x1]
    %v25 = vlaneseq
    %v26 = vshrl.u32 %v25, 7
    %v27 = vsub.s32 0, %v26
    %v28 = vrot.slane %v23, %v27
    %v30 = vsub.f32 %v22, %v28
    %v31 = vld [vmem:[%s2] sm:$0x1]
    %v33 = vlaneseq
    %v34 = vshrl.u32 %v33, 7
    %v35 = vsub.s32 0, %v34
    %v36 = vrot.slane %v31, %v35
    %v38 = vmul.f32 %v30, %v36
    %v39 = vld [vmem:[%s3] sm:$0xff]
    %v40 = vld [vmem:[%s3 + $0x8] sm:$0xff]
    %v41 = vld [vmem:[%s4] sm:$0x1]
    %v43 = vlaneseq
    %v44 = vshrl.u32 %v43, 7
    %v45 = vsub.s32 0, %v44
    %v46 = vrot.slane %v41, %v45
    %vm48 = vcmask 130048
    %v50 = vsel %vm48, %v38, 0
    %52 = vmatprep.subr.mxu0 0.0
    %53 = vmatpush1.msra.mxu0 %v39
    %54 = vmatprep.subr.mxu0 0.0
    %55 = vmatpush1.msra.mxu0 %v40
    %56 = vmatprep.subr.mxu0 0.0
    %57 = vmatpush1.msra.mxu0 0.0
    %58 = vmatprep.subr.mxu0 0.0
    %59 = vmatpush1.msra.mxu0 0.0
    %60 = vmatprep.subr.mxu0 0.0
    %61 = vmatpush1.msra.mxu0 0.0
    %62 = vmatprep.subr.mxu0 0.0
    %63 = vmatpush1.msra.mxu0 0.0
    %64 = vmatprep.subr.mxu0 0.0
    %65 = vmatpush1.msra.mxu0 0.0
    %66 = vmatprep.subr.mxu0 0.0
    %67 = vmatpush1.msra.mxu0 0.0
    %68 = vmatprep.subr.mxu0 0.0
    %69 = vmatpush1.msra.mxu0 0.0
    %70 = vmatprep.subr.mxu0 0.0
    %71 = vmatpush1.msra.mxu0 0.0
    %72 = vmatprep.subr.mxu0 0.0
    %73 = vmatpush1.msra.mxu0 0.0
    %74 = vmatprep.subr.mxu0 0.0
    %75 = vmatpush1.msra.mxu0 0.0
    %76 = vmatprep.subr.mxu0 0.0
    %77 = vmatpush1.msra.mxu0 0.0
    %78 = vmatprep.subr.mxu0 0.0
    %79 = vmatpush1.msra.mxu0 0.0
    %80 = vmatprep.subr.mxu0 0.0
    %81 = vmatpush1.msra.mxu0 0.0
    %82 = vmatprep.subr.mxu0 0.0
    %83 = vmatpush1.msra.mxu0 0.0
    %84 = vmatprep.subr.mxu0 0.0
    %85 = vmatpush1.msra.mxu0 0.0
    %86 = vmatprep.subr.mxu0 0.0
    %87 = vmatpush1.msra.mxu0 0.0
    %88 = vmatprep.subr.mxu0 0.0
    %89 = vmatpush1.msra.mxu0 0.0
    %90 = vmatprep.subr.mxu0 0.0
    %91 = vmatpush1.msra.mxu0 0.0
    %92 = vmatprep.subr.mxu0 0.0
    %93 = vmatpush1.msra.mxu0 0.0
    %94 = vmatprep.subr.mxu0 0.0
    %95 = vmatpush1.msra.mxu0 0.0
    %96 = vmatprep.subr.mxu0 0.0
    %97 = vmatpush1.msra.mxu0 0.0
    %98 = vmatprep.subr.mxu0 0.0
    %99 = vmatpush1.msra.mxu0 0.0
    %100 = vmatprep.subr.mxu0 0.0
    %101 = vmatpush1.msra.mxu0 0.0
    %102 = vmatprep.subr.mxu0 0.0
    %103 = vmatpush1.msra.mxu0 0.0
    %104 = vmatprep.subr.mxu0 0.0
    %105 = vmatpush1.msra.mxu0 0.0
    %106 = vmatprep.subr.mxu0 0.0
    %107 = vmatpush1.msra.mxu0 0.0
    %108 = vmatprep.subr.mxu0 0.0
    %109 = vmatpush1.msra.mxu0 0.0
    %110 = vmatprep.subr.mxu0 0.0
    %111 = vmatpush1.msra.mxu0 0.0
    %112 = vmatprep.subr.mxu0 0.0
    %113 = vmatpush1.msra.mxu0 0.0
    %114 = vmatprep.subr.mxu0 0.0
    %115 = vmatpush1.msra.mxu0 0.0
    %116 = vmatprep.mubr.f32.mxu0 0.0
    %117 = vmatmul.mubr.f32.gmra.mrb[0].mxu0 %v50
    %v118 = vpop.f32.mrb[0].mxu0
    %v119 = vadd.f32 %v46, %v118
    %v120 = vpop.f32.mrb[0].mxu0
    %121 = vdwg.mxu0
    %vm122 = vcmask 261120
    %123 = vst.msk [vmem:[#allocation2] sm:$0xff] %vm122, %v119
    // Predicated region
    $region22: #{_forward_impl.1} parent=1 // pred_check
      _
    $region23: #{_forward_impl.1} parent=1 // pred_check_branch
      %125 = sbr.rel (0) target = $region25
    $region24: #{_forward_impl.1} parent=1 // pred_region
      %s127 = ssub.s32 128, 128
      %128 = vsyncadd [#allocation3], %s127
      %s130 = sshll.u32 [#allocation2], 4
      %s131 = int_to_ptr.vmem [resolvable:$true] %s130
      %133 = dma.vmem_to_hbm [thread:$0]  %s131, 128, %s5, [#allocation3]
    $region25: #{_forward_impl.1} parent=1 // pred_fallthru
      _
    // Predicated region
    $region26: #{_forward_impl.1} parent=1 // pred_check
      _
    $region27: #{_forward_impl.1} parent=1 // pred_check_branch
      %135 = sbr.rel (0) target = $region29
    $region28: #{_forward_impl.1} parent=1 // pred_region
      %136 = dma.done [#allocation3], 128
    $region29: #{_forward_impl.1} parent=1 // pred_fallthru
      _
    %137 = vsyncpa [#allocation3], 1

// kernel: _forward_impl.1
$region0: #{_forward_impl.1}
  #allocation0 [shape = 'u32[]', space=smem, size = 0x4, offset = 0x4, fixed_abs, tag = 'smem constant byte address 0x4 - core index']
  #allocation1 [shape = 'u32[144,128]{1,0:T(1,128)}', space=vmem, size = 0x12000, scoped, tag = 'internal scratch']
  %s0 = inlined_call_operand.vmem [shape: s32[8,16], index: 0, kind: input, shape index: {}]
  %s1 = inlined_call_operand.vmem [shape: f32[1,16], index: 1, kind: input, shape index: {}]
  %s2 = inlined_call_operand.vmem [shape: f32[1,16], index: 2, kind: input, shape index: {}]
  %s3 = inlined_call_operand.vmem [shape: f32[16,32], index: 3, kind: input, shape index: {}]
  %s4 = inlined_call_operand.vmem [shape: f32[1,32], index: 4, kind: input, shape index: {}]
  %s5 = inlined_call_operand.hbm [shape: f32[8,32], index: 5, kind: output, shape index: {}]
  %s6 = sld [smem:[#allocation0]]
  $region30: #{_forward_impl.1} parent=0
    _
  %s8 = ssub.s32 1, %s6
  %s9 = scalar_select 0, %s8, %s6
  $region1: #{_forward_impl.1} parent=0
    #allocation2 [shape = 'u8[4096]{0}', space=vmem, size = 0x1000, scoped, tag = 'output window, operand 0, single buffered']
    #allocation3 [shape = 's32[1]{0}', space=sflag, size = 0x4, scoped, tag = 'scoped memory for _forward_impl.1']
    %10 = vsyncpa [#allocation3], 0
    // Predicated region
    $region2: #{_forward_impl.1} parent=1 // pred_check
      _
    $region3: #{_forward_impl.1} parent=1 // pred_check_branch
      %12 = sbr.rel (0) target = $region5
    $region4: #{_forward_impl.1} parent=1 // pred_region
      _
    $region5: #{_forward_impl.1} parent=1 // pred_fallthru
      _
    // Predicated region
    $region6: #{_forward_impl.1} parent=1 // pred_check
      _
    $region7: #{_forward_impl.1} parent=1 // pred_check_branch
      %14 = sbr.rel (0) target = $region9
    $region8: #{_forward_impl.1} parent=1 // pred_region
      _
    $region9: #{_forward_impl.1} parent=1 // pred_fallthru
      _
    // Predicated region
    $region10: #{_forward_impl.1} parent=1 // pred_check
      _
    $region11: #{_forward_impl.1} parent=1 // pred_check_branch
      %16 = sbr.rel (0) target = $region13
    $region12: #{_forward_impl.1} parent=1 // pred_region
      _
    $region13: #{_forward_impl.1} parent=1 // pred_fallthru
      _
    // Predicated region
    $region14: #{_forward_impl.1} parent=1 // pred_check
      _
    $region15: #{_forward_impl.1} parent=1 // pred_check_branch
      %18 = sbr.rel (0) target = $region17
    $region16: #{_forward_impl.1} parent=1 // pred_region
      _
    $region17: #{_forward_impl.1} parent=1 // pred_fallthru
      _
    // Predicated region
    $region18: #{_forward_impl.1} parent=1 // pred_check
      _
    $region19: #{_forward_impl.1} parent=1 // pred_check_branch
      %20 = sbr.rel (0) target = $region21
    $region20: #{_forward_impl.1} parent=1 // pred_region
      _
    $region21: #{_forward_impl.1} parent=1 // pred_fallthru
      _
    %v21 = vld [vmem:[%s0] sm:$0xff]
    %v22 = vcvt.s32.f32 %v21
    %v23 = vld [vmem:[%s1] sm:$0x1]
    %v25 = vlaneseq
    %v26 = vshrl.u32 %v25, 7
    %v27 = vsub.s32 0, %v26
    %v28 = vrot.slane %v23, %v27
    %v30 = vsub.f32 %v22, %v28
    %v31 = vld [vmem:[%s2] sm:$0x1]
    %v33 = vlaneseq
    %v34 = vshrl.u32 %v33, 7
    %v35 = vsub.s32 0, %v34
    %v36 = vrot.slane %v31, %v35
    %v38 = vmul.f32 %v30, %v36
    %v39 = vld [vmem:[%s3] sm:$0xff]
    %v40 = vld [vmem:[%s3 + $0x8] sm:$0xff]
    %v41 = vld [vmem:[%s4] sm:$0x1]
    %v43 = vlaneseq
    %v44 = vshrl.u32 %v43, 7
    %v45 = vsub.s32 0, %v44
    %v46 = vrot.slane %v41, %v45
    %vm48 = vcmask 130048
    %v50 = vsel %vm48, %v38, 0
    %52 = vmatprep.subr.mxu0 0.0
    %53 = vmatpush1.msra.mxu0 %v39
    %54 = vmatprep.subr.mxu0 0.0
    %55 = vmatpush1.msra.mxu0 %v40
    %56 = vmatprep.subr.mxu0 0.0
    %57 = vmatpush1.msra.mxu0 0.0
    %58 = vmatprep.subr.mxu0 0.0
    %59 = vmatpush1.msra.mxu0 0.0
    %60 = vmatprep.subr.mxu0 0.0
    %61 = vmatpush1.msra.mxu0 0.0
    %62 = vmatprep.subr.mxu0 0.0
    %63 = vmatpush1.msra.mxu0 0.0
    %64 = vmatprep.subr.mxu0 0.0
    %65 = vmatpush1.msra.mxu0 0.0
    %66 = vmatprep.subr.mxu0 0.0
    %67 = vmatpush1.msra.mxu0 0.0
    %68 = vmatprep.subr.mxu0 0.0
    %69 = vmatpush1.msra.mxu0 0.0
    %70 = vmatprep.subr.mxu0 0.0
    %71 = vmatpush1.msra.mxu0 0.0
    %72 = vmatprep.subr.mxu0 0.0
    %73 = vmatpush1.msra.mxu0 0.0
    %74 = vmatprep.subr.mxu0 0.0
    %75 = vmatpush1.msra.mxu0 0.0
    %76 = vmatprep.subr.mxu0 0.0
    %77 = vmatpush1.msra.mxu0 0.0
    %78 = vmatprep.subr.mxu0 0.0
    %79 = vmatpush1.msra.mxu0 0.0
    %80 = vmatprep.subr.mxu0 0.0
    %81 = vmatpush1.msra.mxu0 0.0
    %82 = vmatprep.subr.mxu0 0.0
    %83 = vmatpush1.msra.mxu0 0.0
    %84 = vmatprep.subr.mxu0 0.0
    %85 = vmatpush1.msra.mxu0 0.0
    %86 = vmatprep.subr.mxu0 0.0
    %87 = vmatpush1.msra.mxu0 0.0
    %88 = vmatprep.subr.mxu0 0.0
    %89 = vmatpush1.msra.mxu0 0.0
    %90 = vmatprep.subr.mxu0 0.0
    %91 = vmatpush1.msra.mxu0 0.0
    %92 = vmatprep.subr.mxu0 0.0
    %93 = vmatpush1.msra.mxu0 0.0
    %94 = vmatprep.subr.mxu0 0.0
    %95 = vmatpush1.msra.mxu0 0.0
    %96 = vmatprep.subr.mxu0 0.0
    %97 = vmatpush1.msra.mxu0 0.0
    %98 = vmatprep.subr.mxu0 0.0
    %99 = vmatpush1.msra.mxu0 0.0
    %100 = vmatprep.subr.mxu0 0.0
    %101 = vmatpush1.msra.mxu0 0.0
    %102 = vmatprep.subr.mxu0 0.0
    %103 = vmatpush1.msra.mxu0 0.0
    %104 = vmatprep.subr.mxu0 0.0
    %105 = vmatpush1.msra.mxu0 0.0
    %106 = vmatprep.subr.mxu0 0.0
    %107 = vmatpush1.msra.mxu0 0.0
    %108 = vmatprep.subr.mxu0 0.0
    %109 = vmatpush1.msra.mxu0 0.0
    %110 = vmatprep.subr.mxu0 0.0
    %111 = vmatpush1.msra.mxu0 0.0
    %112 = vmatprep.subr.mxu0 0.0
    %113 = vmatpush1.msra.mxu0 0.0
    %114 = vmatprep.subr.mxu0 0.0
    %115 = vmatpush1.msra.mxu0 0.0
    %116 = vmatprep.mubr.f32.mxu0 0.0
    %117 = vmatmul.mubr.f32.gmra.mrb[0].mxu0 %v50
    %v118 = vpop.f32.mrb[0].mxu0
    %v119 = vadd.f32 %v46, %v118
    %v120 = vpop.f32.mrb[0].mxu0
    %121 = vdwg.mxu0
    %vm122 = vcmask 261120
    %123 = vst.msk [vmem:[#allocation2] sm:$0xff] %vm122, %v119
    // Predicated region
    $region22: #{_forward_impl.1} parent=1 // pred_check
      _
    $region23: #{_forward_impl.1} parent=1 // pred_check_branch
      %125 = sbr.rel (0) target = $region25
    $region24: #{_forward_impl.1} parent=1 // pred_region
      %s127 = ssub.s32 128, 128
      %128 = vsyncadd [#allocation3], %s127
      %s130 = sshll.u32 [#allocation2], 4
      %s131 = int_to_ptr.vmem [resolvable:$true] %s130
      %133 = dma.vmem_to_hbm [thread:$0]  %s131, 128, %s5, [#allocation3]
    $region25: #{_forward_impl.1} parent=1 // pred_fallthru
      _
    // Predicated region
    $region26: #{_forward_impl.1} parent=1 // pred_check
      _
    $region27: #{_forward_impl.1} parent=1 // pred_check_branch
      %135 = sbr.rel (0) target = $region29
    $region28: #{_forward_impl.1} parent=1 // pred_region
      %136 = dma.done [#allocation3], 128
    $region29: #{_forward_impl.1} parent=1 // pred_fallthru
      _
    %137 = vsyncpa [#allocation3], 1

</llo_original>
